<compile_context>
chip_gen: v7x
topology: tpu7x:2x2x1
jax: 0.10.0
libtpu: 0.0.40
codegen_flags: <defaults>
</compile_context>

<pallas_src>
import functools

import jax
import jax.numpy as jnp
from jax import lax
from jax.experimental import pallas as pl
from jax.experimental.pallas import tpu as pltpu

BN_EPS = 1e-5


def _mapping_kernel(*refs, apply_dropout):
    if apply_dropout:
        x_ref, wt_ref, gamma_ref, beta_ref, mask_ref, o_ref = refs
    else:
        x_ref, wt_ref, gamma_ref, beta_ref, o_ref = refs
        mask_ref = None

    # Linear (no bias): full-K matmul on the MXU, fp32 accumulation.
    y = jnp.dot(x_ref[...], wt_ref[...], preferred_element_type=jnp.float32)

    # BatchNorm1d, training mode: per-feature batch mean / biased variance
    # (full batch M lives in this block, so statistics are exact).
    mean = jnp.mean(y, axis=0, keepdims=True)
    var = jnp.mean((y - mean) ** 2, axis=0, keepdims=True)
    y = (y - mean) * lax.rsqrt(var + BN_EPS)
    y = y * gamma_ref[...] + beta_ref[...]

    # ReLU
    y = jnp.maximum(y, 0.0)

    # Dropout (inverted): mask is pre-scaled by 1/(1-p) in the wrapper.
    if apply_dropout:
        y = y * mask_ref[...]

    o_ref[...] = y.astype(o_ref.dtype)


def mapping_forward(x, weight, gamma, beta, *, dropout=0.5, training=True,
                    rng_key=None, matmul_dtype=None, tn=None):
    """x: (M, in_dim); weight: (out_dim, in_dim) torch-style; gamma/beta: (out_dim,)."""
    M, K = x.shape
    N, K2 = weight.shape
    assert K == K2
    out_dtype = x.dtype

    # Glue: torch stores weight as (out_dim, in_dim); kernel does x @ W^T.
    wt = weight.T                              # (in_dim, out_dim)
    if matmul_dtype is not None:               # opt-in fast MXU path (v6e/v7x)
        x = x.astype(matmul_dtype)
        wt = wt.astype(matmul_dtype)

    # Tile over output features only; prefer the widest lane-dense tile.
    if tn is None:
        if N % 128 != 0 or N <= 512:
            tn = N
        else:
            tn = next(c for c in (512, 256, 128) if N % c == 0)
    assert N % tn == 0
    num_j = N // tn

    apply_dropout = training and (0.0 < dropout < 1.0)

    gamma2 = gamma.reshape(1, N).astype(jnp.float32)
    beta2 = beta.reshape(1, N).astype(jnp.float32)

    inputs = [x, wt, gamma2, beta2]
    in_specs = [
        pl.BlockSpec((M, K), lambda j: (0, 0)),    # x: resident, loaded once
        pl.BlockSpec((K, tn), lambda j: (0, j)),   # W^T column block
        pl.BlockSpec((1, tn), lambda j: (0, j)),   # gamma
        pl.BlockSpec((1, tn), lambda j: (0, j)),   # beta
    ]
    if apply_dropout:
        if rng_key is None:
            rng_key = jax.random.PRNGKey(0)
        keep = jax.random.bernoulli(rng_key, 1.0 - dropout, (M, N))
        mask = keep.astype(jnp.float32) * (1.0 / (1.0 - dropout))
        inputs.append(mask)
        in_specs.append(pl.BlockSpec((M, tn), lambda j: (0, j)))

    # Rough VMEM budget (double-buffered blocks); only raise the scoped limit
    # when the defaults would be tight, clamped to v7x's 64 MiB physical VMEM.
    isz = jnp.dtype(x.dtype).itemsize
    est = 2 * (M * K * isz + K * tn * isz + 2 * tn * 4
               + (M * tn * 4 if apply_dropout else 0)
               + M * tn * jnp.dtype(out_dtype).itemsize)
    vmem_limit = None if est < (16 << 20) else int(min(est * 3 // 2, 64 << 20))

    kernel = functools.partial(_mapping_kernel, apply_dropout=apply_dropout)

    return pl.pallas_call(
        kernel,
        out_shape=jax.ShapeDtypeStruct((M, N), out_dtype),
        grid=(num_j,),
        in_specs=in_specs,
        out_specs=pl.BlockSpec((M, tn), lambda j: (0, j)),
        compiler_params=pltpu.CompilerParams(
            dimension_semantics=("parallel",),
            vmem_limit_bytes=vmem_limit),
    )(*inputs)


if __name__ == "__main__":
    # Small shapes consistent with the module: batch=8, in_dim=256, out_dim=256.
    M, IN_DIM, OUT_DIM = 8, 256, 256

    key = jax.random.PRNGKey(0)
    kx, kw, kd = jax.random.split(key, 3)

    x = jax.random.normal(kx, (M, IN_DIM), dtype=jnp.float32)

    # Linear: xavier_normal init, bias=False (since batch_norm=True).
    xavier_std = (2.0 / (IN_DIM + OUT_DIM)) ** 0.5
    weight = jax.random.normal(kw, (OUT_DIM, IN_DIM), dtype=jnp.float32) * xavier_std

    # BatchNorm1d params (default init: gamma=1, beta=0).
    gamma = jnp.ones((OUT_DIM,), dtype=jnp.float32)
    beta = jnp.zeros((OUT_DIM,), dtype=jnp.float32)

    out = mapping_forward(x, weight, gamma, beta,
                          dropout=0.5, training=True, rng_key=kd)
    jax.block_until_ready(out)

    assert out.shape == (M, OUT_DIM)
    assert out.dtype == jnp.float32
    assert bool(jnp.all(jnp.isfinite(out)))
    print("KERNEL_OK")
</pallas_src>

<mosaic_0001>
module attributes {stable_mosaic.version = 11 : i64} {
  func.func @_mapping_kernel(%arg0: i32, %arg1: memref<8x256xf32, #tpu.memory_space<vmem>>, %arg2: memref<256x256xf32, #tpu.memory_space<vmem>>, %arg3: memref<1x256xf32, #tpu.memory_space<vmem>>, %arg4: memref<1x256xf32, #tpu.memory_space<vmem>>, %arg5: memref<8x256xf32, #tpu.memory_space<vmem>>, %arg6: memref<8x256xf32, #tpu.memory_space<vmem>>) attributes {dimension_semantics = [#tpu.dimension_semantics<parallel>], iteration_bounds = array<i64: 1>, scalar_prefetch = 0 : i64, scratch_operands = 0 : i64, tpu.core_type = #tpu.core_type<tc>, window_params = [{pipeline_mode = #tpu.pipeline_mode<synchronous>, transform_indices = @transform_0, window_bounds = array<i64: 8, 256>}, {transform_indices = @transform_1, window_bounds = array<i64: 256, 256>}, {transform_indices = @transform_2, window_bounds = array<i64: 1, 256>}, {transform_indices = @transform_3, window_bounds = array<i64: 1, 256>}, {transform_indices = @transform_4, window_bounds = array<i64: 8, 256>}, {transform_indices = @transform_5, window_bounds = array<i64: 8, 256>}]} {
    %c0 = arith.constant 0 : index
    %c0_0 = arith.constant 0 : index
    %0 = vector.load %arg1[%c0, %c0_0] : memref<8x256xf32, #tpu.memory_space<vmem>>, vector<8x256xf32>
    %c0_1 = arith.constant 0 : index
    %c0_2 = arith.constant 0 : index
    %1 = vector.load %arg2[%c0_1, %c0_2] : memref<256x256xf32, #tpu.memory_space<vmem>>, vector<256x256xf32>
    %cst = arith.constant dense<0.000000e+00> : vector<8x256xf32>
    %2 = tpu.matmul %0, %1, %cst {dimension_numbers = #tpu.dot_dimension_numbers<[1], [0], [0], [1], [0, 0, 1, 1], [], []>} : vector<8x256xf32>, vector<256x256xf32>, vector<8x256xf32> -> vector<8x256xf32>
    %cst_3 = arith.constant dense<0.000000e+00> : vector<256xf32>
    %3 = vector.multi_reduction <add>, %2, %cst_3 [0] : vector<8x256xf32> to vector<256xf32>
    %4 = vector.shape_cast %3 : vector<256xf32> to vector<1x256xf32>
    %cst_4 = arith.constant 8.000000e+00 : f32
    %5 = vector.broadcast %cst_4 : f32 to vector<1x256xf32>
    %6 = arith.divf %4, %5 : vector<1x256xf32>
    %7 = vector.broadcast %6 : vector<1x256xf32> to vector<8x256xf32>
    %8 = arith.subf %2, %7 : vector<8x256xf32>
    %9 = arith.mulf %8, %8 : vector<8x256xf32>
    %cst_5 = arith.constant dense<0.000000e+00> : vector<256xf32>
    %10 = vector.multi_reduction <add>, %9, %cst_5 [0] : vector<8x256xf32> to vector<256xf32>
    %11 = vector.shape_cast %10 : vector<256xf32> to vector<1x256xf32>
    %cst_6 = arith.constant 8.000000e+00 : f32
    %12 = vector.broadcast %cst_6 : f32 to vector<1x256xf32>
    %13 = arith.divf %11, %12 : vector<1x256xf32>
    %14 = vector.broadcast %6 : vector<1x256xf32> to vector<8x256xf32>
    %15 = arith.subf %2, %14 : vector<8x256xf32>
    %cst_7 = arith.constant 9.99999974E-6 : f32
    %16 = vector.broadcast %cst_7 : f32 to vector<1x256xf32>
    %17 = arith.addf %13, %16 : vector<1x256xf32>
    %18 = math.rsqrt %17 : vector<1x256xf32>
    %19 = vector.broadcast %18 : vector<1x256xf32> to vector<8x256xf32>
    %20 = arith.mulf %15, %19 : vector<8x256xf32>
    %c0_8 = arith.constant 0 : index
    %c0_9 = arith.constant 0 : index
    %21 = vector.load %arg3[%c0_8, %c0_9] : memref<1x256xf32, #tpu.memory_space<vmem>>, vector<1x256xf32>
    %22 = vector.broadcast %21 : vector<1x256xf32> to vector<8x256xf32>
    %23 = arith.mulf %20, %22 : vector<8x256xf32>
    %c0_10 = arith.constant 0 : index
    %c0_11 = arith.constant 0 : index
    %24 = vector.load %arg4[%c0_10, %c0_11] : memref<1x256xf32, #tpu.memory_space<vmem>>, vector<1x256xf32>
    %25 = vector.broadcast %24 : vector<1x256xf32> to vector<8x256xf32>
    %26 = arith.addf %23, %25 : vector<8x256xf32>
    %cst_12 = arith.constant 0.000000e+00 : f32
    %27 = vector.broadcast %cst_12 : f32 to vector<8x256xf32>
    %28 = arith.maximumf %26, %27 : vector<8x256xf32>
    %c0_13 = arith.constant 0 : index
    %c0_14 = arith.constant 0 : index
    %29 = vector.load %arg5[%c0_13, %c0_14] : memref<8x256xf32, #tpu.memory_space<vmem>>, vector<8x256xf32>
    %30 = arith.mulf %28, %29 : vector<8x256xf32>
    %c0_15 = arith.constant 0 : index
    %c0_16 = arith.constant 0 : index
    %31 = vector.load %arg6[%c0_15, %c0_16] : memref<8x256xf32, #tpu.memory_space<vmem>>, vector<8x256xf32>
    tpu.vector_store %arg6[%c0_15, %c0_16], %30 {strides = array<i32>} : memref<8x256xf32, #tpu.memory_space<vmem>>, vector<8x256xf32>,
    return
  }
  func.func @transform_0(%arg0: i32) -> (i32, i32) {
    %c0_i32 = arith.constant 0 : i32
    %c0_i32_0 = arith.constant 0 : i32
    %c0_i32_1 = arith.constant 0 : i32
    return %c0_i32, %c0_i32_0 : i32, i32
  }
  func.func @transform_1(%arg0: i32) -> (i32, i32) {
    %c0_i32 = arith.constant 0 : i32
    %c0_i32_0 = arith.constant 0 : i32
    return %c0_i32, %arg0 : i32, i32
  }
  func.func @transform_2(%arg0: i32) -> (i32, i32) {
    %c0_i32 = arith.constant 0 : i32
    %c0_i32_0 = arith.constant 0 : i32
    return %c0_i32, %arg0 : i32, i32
  }
  func.func @transform_3(%arg0: i32) -> (i32, i32) {
    %c0_i32 = arith.constant 0 : i32
    %c0_i32_0 = arith.constant 0 : i32
    return %c0_i32, %arg0 : i32, i32
  }
  func.func @transform_4(%arg0: i32) -> (i32, i32) {
    %c0_i32 = arith.constant 0 : i32
    %c0_i32_0 = arith.constant 0 : i32
    return %c0_i32, %arg0 : i32, i32
  }
  func.func @transform_5(%arg0: i32) -> (i32, i32) {
    %c0_i32 = arith.constant 0 : i32
    %c0_i32_0 = arith.constant 0 : i32
    return %c0_i32, %arg0 : i32, i32
  }
}

</mosaic_0001>

<llo_original>
// kernel: tpu_custom_call.1
$region0: #{tpu_custom_call.1}
  #allocation0 [shape = 'u32[]', space=smem, size = 0x4, offset = 0x4, fixed_abs, tag = 'smem constant byte address 0x4 - core index']
  #allocation1 [shape = 'u32[144,128]{1,0:T(1,128)}', space=vmem, size = 0x12000, scoped, tag = 'internal scratch']
  %s0 = inlined_call_operand.hbm [shape: f32[8,256], index: 0, kind: input, shape index: {}]
  %s1 = inlined_call_operand.hbm [shape: f32[256,256], index: 1, kind: input, shape index: {}]
  %s2 = inlined_call_operand.vmem [shape: f32[1,256], index: 2, kind: input, shape index: {}]
  %s3 = inlined_call_operand.vmem [shape: f32[1,256], index: 3, kind: input, shape index: {}]
  %s4 = inlined_call_operand.hbm [shape: f32[8,256], index: 4, kind: input, shape index: {}]
  %s5 = inlined_call_operand.hbm [shape: f32[8,256], index: 5, kind: output, shape index: {}]
  %s6 = sld [smem:[#allocation0]]
  $region42: #{tpu_custom_call.1} parent=0
    _
  %s8 = ssub.s32 1, %s6
  %s9 = scalar_select 0, %s8, %s6
  $region1: #{tpu_custom_call.1} parent=0
    #allocation2 [shape = 'u8[8192]{0}', space=vmem, size = 0x2000, scoped, tag = 'input window, operand 0, single buffered']
    #allocation3 [shape = 's32[1]{0}', space=sflag, size = 0x4, scoped, tag = 'scoped memory for tpu_custom_call.1']
    #allocation4 [shape = 's32[1]{0}', space=sflag, size = 0x4, scoped, tag = 'scoped memory for tpu_custom_call.1']
    #allocation5 [shape = 'u8[262144]{0}', space=vmem, size = 0x40000, scoped, tag = 'input window, operand 1, single buffered']
    #allocation6 [shape = 's32[1]{0}', space=sflag, size = 0x4, scoped, tag = 'scoped memory for tpu_custom_call.1']
    #allocation7 [shape = 'u8[8192]{0}', space=vmem, size = 0x2000, scoped, tag = 'input window, operand 4, single buffered']
    #allocation8 [shape = 'u8[8192]{0}', space=vmem, size = 0x2000, scoped, tag = 'output window, operand 0, single buffered']
    %10 = vsyncpa [#allocation3], 0
    %11 = vsyncpa [#allocation6], 0
    %12 = vsyncpa [#allocation4], 0
    // Predicated region
    $region2: #{tpu_custom_call.1} parent=1 // pred_check
      _
    $region3: #{tpu_custom_call.1} parent=1 // pred_check_branch
      %14 = sbr.rel (0) target = $region5
    $region4: #{tpu_custom_call.1} parent=1 // pred_region
      %s16 = ssub.s32 256, 256
      %17 = vsyncadd [#allocation3], %s16
      %s19 = sshll.u32 [#allocation2], 4
      %s20 = int_to_ptr.vmem [resolvable:$true] %s19
      %22 = dma.hbm_to_vmem [thread:$0]  %s0, 256, %s20, [#allocation3]
    $region5: #{tpu_custom_call.1} parent=1 // pred_fallthru
      _
    // Predicated region
    $region6: #{tpu_custom_call.1} parent=1 // pred_check
      _
    $region7: #{tpu_custom_call.1} parent=1 // pred_check_branch
      %24 = sbr.rel (0) target = $region9
    $region8: #{tpu_custom_call.1} parent=1 // pred_region
      %s26 = ssub.s32 8192, 8192
      %27 = vsyncadd [#allocation6], %s26
      %s28 = sshll.u32 [#allocation5], 4
      %s29 = int_to_ptr.vmem [resolvable:$true] %s28
      %34 = dma.hbm_to_vmem [thread:$0]  %s1, 8192, %s29, [#allocation6], 256, 256, 16
    $region9: #{tpu_custom_call.1} parent=1 // pred_fallthru
      _
    // Predicated region
    $region10: #{tpu_custom_call.1} parent=1 // pred_check
      _
    $region11: #{tpu_custom_call.1} parent=1 // pred_check_branch
      %36 = sbr.rel (0) target = $region13
    $region12: #{tpu_custom_call.1} parent=1 // pred_region
      _
    $region13: #{tpu_custom_call.1} parent=1 // pred_fallthru
      _
    // Predicated region
    $region14: #{tpu_custom_call.1} parent=1 // pred_check
      _
    $region15: #{tpu_custom_call.1} parent=1 // pred_check_branch
      %38 = sbr.rel (0) target = $region17
    $region16: #{tpu_custom_call.1} parent=1 // pred_region
      _
    $region17: #{tpu_custom_call.1} parent=1 // pred_fallthru
      _
    // Predicated region
    $region18: #{tpu_custom_call.1} parent=1 // pred_check
      _
    $region19: #{tpu_custom_call.1} parent=1 // pred_check_branch
      %40 = sbr.rel (0) target = $region21
    $region20: #{tpu_custom_call.1} parent=1 // pred_region
      %s42 = ssub.s32 256, 256
      %43 = vsyncadd [#allocation6], %s42
      %s45 = sshll.u32 [#allocation7], 4
      %s46 = int_to_ptr.vmem [resolvable:$true] %s45
      %48 = dma.hbm_to_vmem [thread:$0]  %s4, 256, %s46, [#allocation6]
    $region21: #{tpu_custom_call.1} parent=1 // pred_fallthru
      _
    // Predicated region
    $region22: #{tpu_custom_call.1} parent=1 // pred_check
      _
    $region23: #{tpu_custom_call.1} parent=1 // pred_check_branch
      %50 = sbr.rel (0) target = $region25
    $region24: #{tpu_custom_call.1} parent=1 // pred_region
      %51 = dma.done [#allocation3], 256
    $region25: #{tpu_custom_call.1} parent=1 // pred_fallthru
      _
    // Predicated region
    $region26: #{tpu_custom_call.1} parent=1 // pred_check
      _
    $region27: #{tpu_custom_call.1} parent=1 // pred_check_branch
      %53 = sbr.rel (0) target = $region29
    $region28: #{tpu_custom_call.1} parent=1 // pred_region
      %54 = dma.done [#allocation6], 8192
    $region29: #{tpu_custom_call.1} parent=1 // pred_fallthru
      _
    // Predicated region
    $region30: #{tpu_custom_call.1} parent=1 // pred_check
      _
    $region31: #{tpu_custom_call.1} parent=1 // pred_check_branch
      %56 = sbr.rel (0) target = $region33
    $region32: #{tpu_custom_call.1} parent=1 // pred_region
      %57 = dma.done [#allocation6], 256
    $region33: #{tpu_custom_call.1} parent=1 // pred_fallthru
      _
    %v58 = vld [vmem:[#allocation2] sm:$0xff]
    %v59 = vld [vmem:[#allocation2 + $0x8] sm:$0xff]
    %v60 = vld [vmem:[#allocation5] sm:$0xff]
    %v61 = vld [vmem:[#allocation5 + $0x8] sm:$0xff]
    %v62 = vld [vmem:[#allocation5 + $0x10] sm:$0xff]
    %v63 = vld [vmem:[#allocation5 + $0x18] sm:$0xff]
    %v64 = vld [vmem:[#allocation5 + $0x20] sm:$0xff]
    %v65 = vld [vmem:[#allocation5 + $0x28] sm:$0xff]
    %v66 = vld [vmem:[#allocation5 + $0x30] sm:$0xff]
    %v67 = vld [vmem:[#allocation5 + $0x38] sm:$0xff]
    %v68 = vld [vmem:[#allocation5 + $0x40] sm:$0xff]
    %v69 = vld [vmem:[#allocation5 + $0x48] sm:$0xff]
    %v70 = vld [vmem:[#allocation5 + $0x50] sm:$0xff]
    %v71 = vld [vmem:[#allocation5 + $0x58] sm:$0xff]
    %v72 = vld [vmem:[#allocation5 + $0x60] sm:$0xff]
    %v73 = vld [vmem:[#allocation5 + $0x68] sm:$0xff]
    %v74 = vld [vmem:[#allocation5 + $0x70] sm:$0xff]
    %v75 = vld [vmem:[#allocation5 + $0x78] sm:$0xff]
    %v76 = vld [vmem:[#allocation5 + $0x80] sm:$0xff]
    %v77 = vld [vmem:[#allocation5 + $0x88] sm:$0xff]
    %v78 = vld [vmem:[#allocation5 + $0x90] sm:$0xff]
    %v79 = vld [vmem:[#allocation5 + $0x98] sm:$0xff]
    %v80 = vld [vmem:[#allocation5 + $0xa0] sm:$0xff]
    %v81 = vld [vmem:[#allocation5 + $0xa8] sm:$0xff]
    %v82 = vld [vmem:[#allocation5 + $0xb0] sm:$0xff]
    %v83 = vld [vmem:[#allocation5 + $0xb8] sm:$0xff]
    %v84 = vld [vmem:[#allocation5 + $0xc0] sm:$0xff]
    %v85 = vld [vmem:[#allocation5 + $0xc8] sm:$0xff]
    %v86 = vld [vmem:[#allocation5 + $0xd0] sm:$0xff]
    %v87 = vld [vmem:[#allocation5 + $0xd8] sm:$0xff]
    %v88 = vld [vmem:[#allocation5 + $0xe0] sm:$0xff]
    %v89 = vld [vmem:[#allocation5 + $0xe8] sm:$0xff]
    %v90 = vld [vmem:[#allocation5 + $0xf0] sm:$0xff]
    %v91 = vld [vmem:[#allocation5 + $0xf8] sm:$0xff]
    %v92 = vld [vmem:[#allocation5 + $0x100] sm:$0xff]
    %v93 = vld [vmem:[#allocation5 + $0x108] sm:$0xff]
    %v94 = vld [vmem:[#allocation5 + $0x110] sm:$0xff]
    %v95 = vld [vmem:[#allocation5 + $0x118] sm:$0xff]
    %v96 = vld [vmem:[#allocation5 + $0x120] sm:$0xff]
    %v97 = vld [vmem:[#allocation5 + $0x128] sm:$0xff]
    %v98 = vld [vmem:[#allocation5 + $0x130] sm:$0xff]
    %v99 = vld [vmem:[#allocation5 + $0x138] sm:$0xff]
    %v100 = vld [vmem:[#allocation5 + $0x140] sm:$0xff]
    %v101 = vld [vmem:[#allocation5 + $0x148] sm:$0xff]
    %v102 = vld [vmem:[#allocation5 + $0x150] sm:$0xff]
    %v103 = vld [vmem:[#allocation5 + $0x158] sm:$0xff]
    %v104 = vld [vmem:[#allocation5 + $0x160] sm:$0xff]
    %v105 = vld [vmem:[#allocation5 + $0x168] sm:$0xff]
    %v106 = vld [vmem:[#allocation5 + $0x170] sm:$0xff]
    %v107 = vld [vmem:[#allocation5 + $0x178] sm:$0xff]
    %v108 = vld [vmem:[#allocation5 + $0x180] sm:$0xff]
    %v109 = vld [vmem:[#allocation5 + $0x188] sm:$0xff]
    %v110 = vld [vmem:[#allocation5 + $0x190] sm:$0xff]
    %v111 = vld [vmem:[#allocation5 + $0x198] sm:$0xff]
    %v112 = vld [vmem:[#allocation5 + $0x1a0] sm:$0xff]
    %v113 = vld [vmem:[#allocation5 + $0x1a8] sm:$0xff]
    %v114 = vld [vmem:[#allocation5 + $0x1b0] sm:$0xff]
    %v115 = vld [vmem:[#allocation5 + $0x1b8] sm:$0xff]
    %v116 = vld [vmem:[#allocation5 + $0x1c0] sm:$0xff]
    %v117 = vld [vmem:[#allocation5 + $0x1c8] sm:$0xff]
    %v118 = vld [vmem:[#allocation5 + $0x1d0] sm:$0xff]
    %v119 = vld [vmem:[#allocation5 + $0x1d8] sm:$0xff]
    %v120 = vld [vmem:[#allocation5 + $0x1e0] sm:$0xff]
    %v121 = vld [vmem:[#allocation5 + $0x1e8] sm:$0xff]
    %v122 = vld [vmem:[#allocation5 + $0x1f0] sm:$0xff]
    %v123 = vld [vmem:[#allocation5 + $0x1f8] sm:$0xff]
    %124 = vmatprep.subr.mxu0 %v61
    %125 = vmatpush1.msra.mxu0 %v60
    %126 = vmatprep.subr.mxu0 %v63
    %127 = vmatpush1.msra.mxu0 %v62
    %128 = vmatprep.subr.mxu0 %v65
    %129 = vmatpush1.msra.mxu0 %v64
    %130 = vmatprep.subr.mxu0 %v67
    %131 = vmatpush1.msra.mxu0 %v66
    %132 = vmatprep.subr.mxu0 %v69
    %133 = vmatpush1.msra.mxu0 %v68
    %134 = vmatprep.subr.mxu0 %v71
    %135 = vmatpush1.msra.mxu0 %v70
    %136 = vmatprep.subr.mxu0 %v73
    %137 = vmatpush1.msra.mxu0 %v72
    %138 = vmatprep.subr.mxu0 %v75
    %139 = vmatpush1.msra.mxu0 %v74
    %140 = vmatprep.subr.mxu0 %v77
    %141 = vmatpush1.msra.mxu0 %v76
    %142 = vmatprep.subr.mxu0 %v79
    %143 = vmatpush1.msra.mxu0 %v78
    %144 = vmatprep.subr.mxu0 %v81
    %145 = vmatpush1.msra.mxu0 %v80
    %146 = vmatprep.subr.mxu0 %v83
    %147 = vmatpush1.msra.mxu0 %v82
    %148 = vmatprep.subr.mxu0 %v85
    %149 = vmatpush1.msra.mxu0 %v84
    %150 = vmatprep.subr.mxu0 %v87
    %151 = vmatpush1.msra.mxu0 %v86
    %152 = vmatprep.subr.mxu0 %v89
    %153 = vmatpush1.msra.mxu0 %v88
    %154 = vmatprep.subr.mxu0 %v91
    %155 = vmatpush1.msra.mxu0 %v90
    %156 = vmatprep.subr.mxu0 %v93
    %157 = vmatpush1.msra.mxu0 %v92
    %158 = vmatprep.subr.mxu0 %v95
    %159 = vmatpush1.msra.mxu0 %v94
    %160 = vmatprep.subr.mxu0 %v97
    %161 = vmatpush1.msra.mxu0 %v96
    %162 = vmatprep.subr.mxu0 %v99
    %163 = vmatpush1.msra.mxu0 %v98
    %164 = vmatprep.subr.mxu0 %v101
    %165 = vmatpush1.msra.mxu0 %v100
    %166 = vmatprep.subr.mxu0 %v103
    %167 = vmatpush1.msra.mxu0 %v102
    %168 = vmatprep.subr.mxu0 %v105
    %169 = vmatpush1.msra.mxu0 %v104
    %170 = vmatprep.subr.mxu0 %v107
    %171 = vmatpush1.msra.mxu0 %v106
    %172 = vmatprep.subr.mxu0 %v109
    %173 = vmatpush1.msra.mxu0 %v108
    %174 = vmatprep.subr.mxu0 %v111
    %175 = vmatpush1.msra.mxu0 %v110
    %176 = vmatprep.subr.mxu0 %v113
    %177 = vmatpush1.msra.mxu0 %v112
    %178 = vmatprep.subr.mxu0 %v115
    %179 = vmatpush1.msra.mxu0 %v114
    %180 = vmatprep.subr.mxu0 %v117
    %181 = vmatpush1.msra.mxu0 %v116
    %182 = vmatprep.subr.mxu0 %v119
    %183 = vmatpush1.msra.mxu0 %v118
    %184 = vmatprep.subr.mxu0 %v121
    %185 = vmatpush1.msra.mxu0 %v120
    %186 = vmatprep.subr.mxu0 %v123
    %187 = vmatpush1.msra.mxu0 %v122
    %188 = vmatprep.mubr.f32.mxu0 %v59
    %189 = vmatmul.mubr.f32.gmra.mrb[0].mxu0 %v58
    %v190 = vpop.f32.mrb[0].mxu0
    %v191 = vadd.f32 0.0, %v190
    %v192 = vpop.f32.mrb[0].mxu0
    %v193 = vadd.f32 0.0, %v192
    %194 = vdwg.mxu0
    %v195 = vrot.slane %v191, 4
    %v196 = vadd.f32 %v191, %v195
    %v197 = vrot.slane %v196, 2
    %v198 = vadd.f32 %v196, %v197
    %v199 = vrot.slane %v198, 1
    %v200 = vadd.f32 %v198, %v199
    %v201 = vrot.slane %v193, 4
    %v202 = vadd.f32 %v193, %v201
    %v203 = vrot.slane %v202, 2
    %v204 = vadd.f32 %v202, %v203
    %v205 = vrot.slane %v204, 1
    %v206 = vadd.f32 %v204, %v205
    %v207 = vrcp.pop 8.0
    %v208 = vmul.f32 %v200, %v207
    %v209 = vmul.f32 %v206, %v207
    %v210 = vsub.f32 %v191, %v208
    %v211 = vsub.f32 %v193, %v209
    %v212 = vmul.f32 %v210, %v210
    %v213 = vmul.f32 %v211, %v211
    %v214 = vrot.slane %v212, 4
    %v215 = vadd.f32 %v212, %v214
    %v216 = vrot.slane %v215, 2
    %v217 = vadd.f32 %v215, %v216
    %v218 = vrot.slane %v217, 1
    %v219 = vadd.f32 %v217, %v218
    %v220 = vrot.slane %v213, 4
    %v221 = vadd.f32 %v213, %v220
    %v222 = vrot.slane %v221, 2
    %v223 = vadd.f32 %v221, %v222
    %v224 = vrot.slane %v223, 1
    %v225 = vadd.f32 %v223, %v224
    %v226 = vmul.f32 %v219, %v207
    %v227 = vmul.f32 %v225, %v207
    %v228 = vadd.f32 %v226, 1e-05
    %v229 = vadd.f32 %v227, 1e-05
    %v230 = vrsqrt.pop %v228
    %v231 = vrsqrt.pop %v229
    %v232 = vmul.f32 %v210, %v230
    %v233 = vmul.f32 %v211, %v231
    %v234 = vld [vmem:[%s2] sm:$0x3]
    %v236 = vlaneseq
    %v237 = vshrl.u32 %v236, 7
    %v238 = vsub.s32 0, %v237
    %v239 = vrot.slane %v234, %v238
    %v240 = vlaneseq
    %v241 = vshrl.u32 %v240, 7
    %v242 = vsub.s32 1, %v241
    %v243 = vrot.slane %v234, %v242
    %v246 = vmul.f32 %v232, %v239
    %v247 = vmul.f32 %v233, %v243
    %v248 = vld [vmem:[%s3] sm:$0x3]
    %v250 = vlaneseq
    %v251 = vshrl.u32 %v250, 7
    %v252 = vsub.s32 0, %v251
    %v253 = vrot.slane %v248, %v252
    %v254 = vlaneseq
    %v255 = vshrl.u32 %v254, 7
    %v256 = vsub.s32 1, %v255
    %v257 = vrot.slane %v248, %v256
    %v260 = vadd.f32 %v246, %v253
    %v261 = vadd.f32 %v247, %v257
    %v262 = vmax.f32 %v260, 0.0
    %v263 = vmax.f32 %v261, 0.0
    %v264 = vld [vmem:[#allocation7] sm:$0xff]
    %v265 = vld [vmem:[#allocation7 + $0x8] sm:$0xff]
    %v266 = vmul.f32 %v262, %v264
    %v267 = vmul.f32 %v263, %v265
    %268 = vst [vmem:[#allocation8] sm:$0xff] %v266
    %269 = vst [vmem:[#allocation8 + $0x8] sm:$0xff] %v267
    // Predicated region
    $region34: #{tpu_custom_call.1} parent=1 // pred_check
      _
    $region35: #{tpu_custom_call.1} parent=1 // pred_check_branch
      %271 = sbr.rel (0) target = $region37
    $region36: #{tpu_custom_call.1} parent=1 // pred_region
      %s273 = ssub.s32 256, 256
      %274 = vsyncadd [#allocation4], %s273
      %s276 = sshll.u32 [#allocation8], 4
      %s277 = int_to_ptr.vmem [resolvable:$true] %s276
      %279 = dma.vmem_to_hbm [thread:$0]  %s277, 256, %s5, [#allocation4]
    $region37: #{tpu_custom_call.1} parent=1 // pred_fallthru
      _
    // Predicated region
    $region38: #{tpu_custom_call.1} parent=1 // pred_check
      _
    $region39: #{tpu_custom_call.1} parent=1 // pred_check_branch
      %281 = sbr.rel (0) target = $region41
    $region40: #{tpu_custom_call.1} parent=1 // pred_region
      %282 = dma.done [#allocation4], 256
    $region41: #{tpu_custom_call.1} parent=1 // pred_fallthru
      _
    %283 = vsyncpa [#allocation3], 1
    %284 = vsyncpa [#allocation6], 1
    %285 = vsyncpa [#allocation4], 1

</llo_original>
